<compile_context>
chip_gen: v7x
topology: tpu7x:2x2x1
jax: 0.10.0
libtpu: 0.0.40
codegen_flags: <defaults>
</compile_context>

<pallas_src>
import jax
import jax.numpy as jnp
from jax import lax
from jax.experimental import pallas as pl
from jax.experimental.pallas import tpu as pltpu


def _round_up(x, m):
    return ((x + m - 1) // m) * m


def _tagger_head_kernel(x_ref, w_ref, b_ref, logp_ref, prob_ref, lbl_ref):
    # x_ref: (TM, H) bf16 ; w_ref: (H, L) bf16 ; b_ref: (1, L) f32
    # Linear head on the MXU, f32 accumulation, bias add in f32.
    logits = jnp.dot(x_ref[...], w_ref[...],
                     preferred_element_type=jnp.float32) + b_ref[...]
    tm, l = logits.shape

    # Numerically stable log-softmax; reuse p = exp(shifted) for both the
    # denominator and the probabilities output (one exp pass per tile).
    m = jnp.max(logits, axis=-1, keepdims=True)
    shifted = logits - m
    p = jnp.exp(shifted)
    s = jnp.sum(p, axis=-1, keepdims=True)
    logp_ref[...] = shifted - jnp.log(s)
    prob_ref[...] = p * pl.reciprocal(s, approx=True)   # EUP slot, ~free

    # Fused argmax with first-max tie-breaking (matches torch.argmax).
    col = lax.broadcasted_iota(jnp.int32, (tm, l), 1)
    cand = jnp.where(logits == m, col, l)
    lbl_ref[...] = jnp.min(cand, axis=-1, keepdims=True).astype(jnp.int32)


def _vmem_limit_bytes(tile_bytes_est):
    # Per-generation cap: physical VMEM per TensorCore minus headroom for Mosaic
    # internal scratch (v7x: 64 MiB -> ~48 MiB usable; v5e/v6e: 128 MiB -> ~112 MiB).
    try:
        cap = int(pltpu.get_tpu_info().vmem_capacity_bytes) - (16 << 20)
    except Exception:
        cap = 48 << 20           # conservative fallback valid on every generation
    cap = max(cap, 16 << 20)
    return int(min(cap, max(32 << 20, 2 * tile_bytes_est)))


def tagger_head(hidden, w, b, *, tm=1024):
    """hidden: [N, H] (bf16 preferred), w: [H, L], b: [L]
       -> (log_probs [N, L] f32, probs [N, L] f32, labels [N] i32)."""
    N, H = hidden.shape
    L = w.shape[1]

    if hidden.dtype != jnp.bfloat16:
        # Ideally hidden already arrives in bf16 from the encoder (no extra pass).
        hidden = hidden.astype(jnp.bfloat16)
    w_bf = w.astype(jnp.bfloat16)
    b_f32 = b.astype(jnp.float32).reshape(1, L)

    # Row tile: multiple of 8; clamp so there are at least 2 grid blocks
    # (keeps both v7x TensorCores busy); N is NOT padded — the ragged last
    # block is handled by the grid/out_shape (OOB rows are never written).
    half = _round_up(max(-(-N // 2), 1), 8)
    tm_eff = max(8, min(_round_up(tm, 8), half))
    n_blocks = -(-N // tm_eff)

    out_shapes = (
        jax.ShapeDtypeStruct((N, L), jnp.float32),
        jax.ShapeDtypeStruct((N, L), jnp.float32),
        jax.ShapeDtypeStruct((N, 1), jnp.int32),
    )

    # Rough double-buffered VMEM need for the per-step tiles.
    est = (2 * tm_eff * H * 2          # hidden tile, bf16
           + 2 * H * L * 2             # weight (resident)
           + 2 * L * 4                 # bias (resident)
           + 2 * 2 * tm_eff * L * 4    # two f32 output tiles
           + 2 * tm_eff * 4)           # labels tile

    cost = pl.CostEstimate(
        flops=2 * N * H * L,
        transcendentals=N * (L + 1),
        bytes_accessed=N * H * 2 + H * L * 2 + L * 4 + 2 * N * L * 4 + N * 4,
    )

    logp, prob, lbl = pl.pallas_call(
        _tagger_head_kernel,
        out_shape=out_shapes,
        grid_spec=pltpu.PrefetchScalarGridSpec(
            num_scalar_prefetch=0,
            grid=(n_blocks,),
            in_specs=[
                pl.BlockSpec((tm_eff, H), lambda i: (i, 0)),   # streaming rows
                pl.BlockSpec((H, L), lambda i: (0, 0)),        # weight (resident)
                pl.BlockSpec((1, L), lambda i: (0, 0)),        # bias (resident)
            ],
            out_specs=[
                pl.BlockSpec((tm_eff, L), lambda i: (i, 0)),
                pl.BlockSpec((tm_eff, L), lambda i: (i, 0)),
                pl.BlockSpec((tm_eff, 1), lambda i: (i, 0)),
            ],
        ),
        compiler_params=pltpu.CompilerParams(
            dimension_semantics=("parallel",),
            vmem_limit_bytes=_vmem_limit_bytes(est)),
        cost_estimate=cost,
    )(hidden, w_bf, b_f32)

    return logp, prob, lbl[:, 0]


def forward(input_ids, params):
    """Mirrors the derived-class forward: encoder -> head -> log_softmax/probs/argmax."""
    B, S = input_ids.shape
    # Encoder stand-in (glue): deterministic bf16 embedding lookup -> [B, S, H].
    hidden = params["embedding"][input_ids]
    H = hidden.shape[-1]
    L = params["head_w"].shape[1]
    logp_flat, prob_flat, lbl_flat = tagger_head(
        hidden.reshape(B * S, H), params["head_w"], params["head_b"])
    return {
        "log_probs_tensor": logp_flat.reshape(B, S, L),
        "probs": prob_flat.reshape(B, S, L),
        "labels": lbl_flat.reshape(B, S),
    }


if __name__ == "__main__":
    # Small shapes consistent with a tagging model.
    B, S, H, L, VOCAB = 2, 8, 32, 16, 50

    key = jax.random.PRNGKey(0)
    k_emb, k_w, k_b, k_ids = jax.random.split(key, 4)

    params = {
        # bf16 embedding so the encoder stand-in yields bf16 hidden directly.
        "embedding": (jax.random.normal(k_emb, (VOCAB, H), dtype=jnp.float32)
                      * 0.1).astype(jnp.bfloat16),
        "head_w": jax.random.normal(k_w, (H, L), dtype=jnp.float32) * 0.1,
        "head_b": jax.random.normal(k_b, (L,), dtype=jnp.float32) * 0.01,
    }
    input_ids = jax.random.randint(k_ids, (B, S), 0, VOCAB, dtype=jnp.int32)

    out = forward(input_ids, params)
    jax.block_until_ready(out)

    # Reference with the same bf16-input / f32-accumulation numerics as the kernel.
    hidden = params["embedding"][input_ids]
    logits_ref = jnp.dot(hidden.reshape(B * S, H),
                         params["head_w"].astype(jnp.bfloat16),
                         preferred_element_type=jnp.float32).reshape(B, S, L)
    logits_ref = logits_ref + params["head_b"]
    logp_ref = jax.nn.log_softmax(logits_ref, axis=-1)

    assert jnp.allclose(out["log_probs_tensor"], logp_ref, atol=2e-4), "log_probs mismatch"
    # probs use an approx reciprocal (2^-12 relative) -> slightly looser tolerance.
    assert jnp.allclose(out["probs"], jnp.exp(logp_ref), atol=1e-3), "probs mismatch"
    assert jnp.array_equal(out["labels"],
                           jnp.argmax(logp_ref, axis=-1).astype(jnp.int32)), "labels mismatch"

    print("KERNEL_OK")
</pallas_src>

<mosaic_0001>
module attributes {stable_mosaic.version = 11 : i64} {
  func.func @_tagger_head_kernel(%arg0: i32, %arg1: memref<8x32xbf16, #tpu.memory_space<vmem>>, %arg2: memref<32x16xbf16, #tpu.memory_space<vmem>>, %arg3: memref<1x16xf32, #tpu.memory_space<vmem>>, %arg4: memref<8x16xf32, #tpu.memory_space<vmem>>, %arg5: memref<8x16xf32, #tpu.memory_space<vmem>>, %arg6: memref<8x1xi32, #tpu.memory_space<vmem>>) attributes {dimension_semantics = [#tpu.dimension_semantics<parallel>], iteration_bounds = array<i64: 2>, scalar_prefetch = 0 : i64, scratch_operands = 0 : i64, tpu.core_type = #tpu.core_type<tc>, window_params = [{transform_indices = @transform_0, window_bounds = array<i64: 8, 32>}, {pipeline_mode = #tpu.pipeline_mode<synchronous>, transform_indices = @transform_1, window_bounds = array<i64: 32, 16>}, {pipeline_mode = #tpu.pipeline_mode<synchronous>, transform_indices = @transform_2, window_bounds = array<i64: 1, 16>}, {transform_indices = @transform_3, window_bounds = array<i64: 8, 16>}, {transform_indices = @transform_4, window_bounds = array<i64: 8, 16>}, {transform_indices = @transform_5, window_bounds = array<i64: 8, 1>}]} {
    %c0 = arith.constant 0 : index
    %c0_0 = arith.constant 0 : index
    %0 = vector.load %arg1[%c0, %c0_0] : memref<8x32xbf16, #tpu.memory_space<vmem>>, vector<8x32xbf16>
    %c0_1 = arith.constant 0 : index
    %c0_2 = arith.constant 0 : index
    %1 = vector.load %arg2[%c0_1, %c0_2] : memref<32x16xbf16, #tpu.memory_space<vmem>>, vector<32x16xbf16>
    %cst = arith.constant dense<0.000000e+00> : vector<8x16xf32>
    %2 = tpu.matmul %0, %1, %cst {dimension_numbers = #tpu.dot_dimension_numbers<[1], [0], [0], [1], [0, 0, 1, 1], [], []>} : vector<8x32xbf16>, vector<32x16xbf16>, vector<8x16xf32> -> vector<8x16xf32>
    %c0_3 = arith.constant 0 : index
    %c0_4 = arith.constant 0 : index
    %3 = vector.load %arg3[%c0_3, %c0_4] : memref<1x16xf32, #tpu.memory_space<vmem>>, vector<1x16xf32>
    %4 = vector.broadcast %3 : vector<1x16xf32> to vector<8x16xf32>
    %5 = arith.addf %2, %4 : vector<8x16xf32>
    %cst_5 = arith.constant dense<0xFF800000> : vector<8xf32>
    %6 = vector.multi_reduction <maximumf>, %5, %cst_5 [1] : vector<8x16xf32> to vector<8xf32>
    %7 = vector.shape_cast %6 : vector<8xf32> to vector<8x1xf32>
    %8 = vector.broadcast %7 : vector<8x1xf32> to vector<8x16xf32>
    %9 = arith.subf %5, %8 : vector<8x16xf32>
    %10 = math.exp %9 : vector<8x16xf32>
    %cst_6 = arith.constant dense<0.000000e+00> : vector<8xf32>
    %11 = vector.multi_reduction <add>, %10, %cst_6 [1] : vector<8x16xf32> to vector<8xf32>
    %12 = vector.shape_cast %11 : vector<8xf32> to vector<8x1xf32>
    %13 = math.log %12 : vector<8x1xf32>
    %14 = vector.broadcast %13 : vector<8x1xf32> to vector<8x16xf32>
    %15 = arith.subf %9, %14 : vector<8x16xf32>
    %c0_7 = arith.constant 0 : index
    %c0_8 = arith.constant 0 : index
    %16 = vector.load %arg4[%c0_7, %c0_8] : memref<8x16xf32, #tpu.memory_space<vmem>>, vector<8x16xf32>
    tpu.vector_store %arg4[%c0_7, %c0_8], %15 {strides = array<i32>} : memref<8x16xf32, #tpu.memory_space<vmem>>, vector<8x16xf32>,
    %17 = tpu.reciprocal %12 {approx = true} : vector<8x1xf32> -> vector<8x1xf32>
    %18 = vector.broadcast %17 : vector<8x1xf32> to vector<8x16xf32>
    %19 = arith.mulf %10, %18 : vector<8x16xf32>
    %c0_9 = arith.constant 0 : index
    %c0_10 = arith.constant 0 : index
    %20 = vector.load %arg5[%c0_9, %c0_10] : memref<8x16xf32, #tpu.memory_space<vmem>>, vector<8x16xf32>
    tpu.vector_store %arg5[%c0_9, %c0_10], %19 {strides = array<i32>} : memref<8x16xf32, #tpu.memory_space<vmem>>, vector<8x16xf32>,
    %21 = tpu.iota {dimensions = array<i32: 1>} : vector<8x16xi32>
    %22 = vector.broadcast %7 : vector<8x1xf32> to vector<8x16xf32>
    %23 = arith.cmpf oeq, %5, %22 : vector<8x16xf32>
    %c16_i32 = arith.constant 16 : i32
    %24 = vector.broadcast %c16_i32 : i32 to vector<8x16xi32>
    %25 = arith.select %23, %21, %24 : vector<8x16xi1>, vector<8x16xi32>
    %cst_11 = arith.constant dense<2147483647> : vector<8xi32>
    %26 = vector.multi_reduction <minsi>, %25, %cst_11 [1] : vector<8x16xi32> to vector<8xi32>
    %27 = vector.shape_cast %26 : vector<8xi32> to vector<8x1xi32>
    %c0_12 = arith.constant 0 : index
    %c0_13 = arith.constant 0 : index
    %28 = vector.load %arg6[%c0_12, %c0_13] : memref<8x1xi32, #tpu.memory_space<vmem>>, vector<8x1xi32>
    tpu.vector_store %arg6[%c0_12, %c0_13], %27 {strides = array<i32>} : memref<8x1xi32, #tpu.memory_space<vmem>>, vector<8x1xi32>,
    return
  }
  func.func @transform_0(%arg0: i32) -> (i32, i32) {
    %c0_i32 = arith.constant 0 : i32
    %c0_i32_0 = arith.constant 0 : i32
    return %arg0, %c0_i32 : i32, i32
  }
  func.func @transform_1(%arg0: i32) -> (i32, i32) {
    %c0_i32 = arith.constant 0 : i32
    %c0_i32_0 = arith.constant 0 : i32
    %c0_i32_1 = arith.constant 0 : i32
    return %c0_i32, %c0_i32_0 : i32, i32
  }
  func.func @transform_2(%arg0: i32) -> (i32, i32) {
    %c0_i32 = arith.constant 0 : i32
    %c0_i32_0 = arith.constant 0 : i32
    %c0_i32_1 = arith.constant 0 : i32
    return %c0_i32, %c0_i32_0 : i32, i32
  }
  func.func @transform_3(%arg0: i32) -> (i32, i32) {
    %c0_i32 = arith.constant 0 : i32
    %c0_i32_0 = arith.constant 0 : i32
    return %arg0, %c0_i32 : i32, i32
  }
  func.func @transform_4(%arg0: i32) -> (i32, i32) {
    %c0_i32 = arith.constant 0 : i32
    %c0_i32_0 = arith.constant 0 : i32
    return %arg0, %c0_i32 : i32, i32
  }
  func.func @transform_5(%arg0: i32) -> (i32, i32) {
    %c0_i32 = arith.constant 0 : i32
    %c0_i32_0 = arith.constant 0 : i32
    return %arg0, %c0_i32 : i32, i32
  }
}

</mosaic_0001>

<llo_original>
// kernel: tpu_custom_call.1
$region0: #{tpu_custom_call.1}
  #allocation0 [shape = 'u32[]', space=smem, size = 0x4, offset = 0x4, fixed_abs, tag = 'smem constant byte address 0x4 - core index']
  #allocation1 [shape = 'u32[144,128]{1,0:T(1,128)}', space=vmem, size = 0x12000, scoped, tag = 'internal scratch']
  %s0 = inlined_call_operand.vmem [shape: bf16[16,32], index: 0, kind: input, shape index: {}]
  %s1 = inlined_call_operand.vmem [shape: bf16[32,16], index: 1, kind: input, shape index: {}]
  %s2 = inlined_call_operand.vmem [shape: f32[1,16], index: 2, kind: input, shape index: {}]
  %s3 = inlined_call_operand.hbm [shape: f32[16,16], index: 3, kind: output, shape index: {0}]
  %s4 = inlined_call_operand.hbm [shape: f32[16,16], index: 4, kind: output, shape index: {1}]
  %s5 = inlined_call_operand.vmem [shape: s32[16,1], index: 5, kind: output, shape index: {2}]
  %6 = xla_tuple %s3, %s4, %s5
  %s7 = sld [smem:[#allocation0]]
  $region61: #{tpu_custom_call.1} parent=0
    _
  %s9 = ssub.s32 1, %s7
  %s10 = scalar_select 0, %s9, %s7
  $region1: #{tpu_custom_call.1} parent=0
    #allocation2 [shape = 'u8[8192]{0}', space=vmem, size = 0x2000, scoped, tag = 'output window, operand 0']
    #allocation3 [shape = 's32[2]{0}', space=sflag, size = 0x8, scoped, tag = 'scoped memory for tpu_custom_call.1']
    #allocation4 [shape = 'u8[8192]{0}', space=vmem, size = 0x2000, scoped, tag = 'output window, operand 1']
    #allocation5 [shape = 's32[2]{0}', space=sflag, size = 0x8, scoped, tag = 'scoped memory for tpu_custom_call.1']
    %11 = vsyncpa [#allocation3], 0
    %s12 = scalar_lea.sflag [#allocation3], 1
    %13 = vsyncpa %s12, 0
    %14 = vsyncpa [#allocation5], 0
    %s15 = scalar_lea.sflag [#allocation5], 1
    %16 = vsyncpa %s15, 0
    loop: start=0, step=1, limit=4
    $region2: #{tpu_custom_call.1} parent=1 // loop_pre_header
      _
    $region3: #{tpu_custom_call.1} parent=1 // loop_header
      %s18 = sphi 0, %s22
      %p19 = scmp.ge.s32.totalorder %s18, 4
      %s28 = sphi 0, %s30
      %s31 = sphi 0, %s28
      %s32 = sphi 0, %s31
      %s48 = sphi 0, %s32
      %s52 = sphi 0, %s52
      %s54 = sphi 0, %s52
      %s55 = sphi 0, %s54
      %s69 = sphi 0, %s55
      %s73 = sphi 0, %s73
      %s75 = sphi 0, %s73
      %s76 = sphi 0, %s75
      %s90 = sphi 0, %s76
      %s96 = sphi 0, %s98
      %s99 = sphi 0, %s96
      %s100 = sphi 0, %s99
      %s116 = sphi 0, %s100
      %s122 = sphi 0, %s124
      %s125 = sphi 0, %s122
      %s126 = sphi 0, %s125
      %s142 = sphi 0, %s126
      %s148 = sphi 0, %s150
      %s151 = sphi 0, %s148
      %s152 = sphi 0, %s151
      %s168 = sphi 0, %s152
    $region4: #{tpu_custom_call.1} parent=1 // loop_header_branch
      %21 = sbr.rel (%p19) target = $region8
    $region5: #{tpu_custom_call.1} parent=1 // loop_body
      %s23 = ssub.s32 %s18, 1
      %s24 = ssub.s32 %s18, 2
      %s25 = sadd.s32 %s18, 1
      %s26 = ssub.s32 %s18, %s25
      %p27 = scmp.eq.s32.totalorder %s26, 0
      %s29 = sadd.s32 %s28, 1
      %s30 = scalar_select %p27, %s28, %s29
      %p33 = pneg %p27
      %p34 = scmp.eq.s32.totalorder %s18, 1
      %p35 = por %p33, %p34
      %p36 = scmp.ne.s32.totalorder %s28, %s31
      %p37 = scmp.eq.s32.totalorder %s18, 0
      %p38 = por %p36, %p37
      %p39 = scmp.ne.s32.totalorder %s28, %s31
      %p40 = scmp.eq.s32.totalorder %s23, 1
      %p41 = por %p39, %p40
      %p42 = scmp.ne.s32.totalorder %s31, %s32
      %p43 = scmp.eq.s32.totalorder %s23, 0
      %p44 = por %p42, %p43
      %p45 = scmp.ne.s32.totalorder %s31, %s32
      %p46 = scmp.eq.s32.totalorder %s24, 1
      %p47 = por %p45, %p46
      %p49 = scmp.ne.s32.totalorder %s32, %s48
      %p50 = scmp.eq.s32.totalorder %s24, 0
      %p51 = por %p49, %p50
      %s53 = sadd.s32 %s52, 1
      %p56 = scmp.eq.s32.totalorder %s18, 1
      %p57 = scmp.ne.s32.totalorder %s52, %s54
      %p58 = scmp.eq.s32.totalorder %s18, 0
      %p59 = por %p57, %p58
      %p60 = scmp.ne.s32.totalorder %s52, %s54
      %p61 = scmp.eq.s32.totalorder %s23, 1
      %p62 = por %p60, %p61
      %p63 = scmp.ne.s32.totalorder %s54, %s55
      %p64 = scmp.eq.s32.totalorder %s23, 0
      %p65 = por %p63, %p64
      %p66 = scmp.ne.s32.totalorder %s54, %s55
      %p67 = scmp.eq.s32.totalorder %s24, 1
      %p68 = por %p66, %p67
      %p70 = scmp.ne.s32.totalorder %s55, %s69
      %p71 = scmp.eq.s32.totalorder %s24, 0
      %p72 = por %p70, %p71
      %s74 = sadd.s32 %s73, 1
      %p77 = scmp.eq.s32.totalorder %s18, 1
      %p78 = scmp.ne.s32.totalorder %s73, %s75
      %p79 = scmp.eq.s32.totalorder %s18, 0
      %p80 = por %p78, %p79
      %p81 = scmp.ne.s32.totalorder %s73, %s75
      %p82 = scmp.eq.s32.totalorder %s23, 1
      %p83 = por %p81, %p82
      %p84 = scmp.ne.s32.totalorder %s75, %s76
      %p85 = scmp.eq.s32.totalorder %s23, 0
      %p86 = por %p84, %p85
      %p87 = scmp.ne.s32.totalorder %s75, %s76
      %p88 = scmp.eq.s32.totalorder %s24, 1
      %p89 = por %p87, %p88
      %p91 = scmp.ne.s32.totalorder %s76, %s90
      %p92 = scmp.eq.s32.totalorder %s24, 0
      %p93 = por %p91, %p92
      %s94 = ssub.s32 %s18, %s25
      %p95 = scmp.eq.s32.totalorder %s94, 0
      %s97 = sadd.s32 %s96, 1
      %s98 = scalar_select %p95, %s96, %s97
      %p101 = pneg %p95
      %p102 = scmp.eq.s32.totalorder %s18, 1
      %p103 = por %p101, %p102
      %p104 = scmp.ne.s32.totalorder %s96, %s99
      %p105 = scmp.eq.s32.totalorder %s18, 0
      %p106 = por %p104, %p105
      %p107 = scmp.ne.s32.totalorder %s96, %s99
      %p108 = scmp.eq.s32.totalorder %s23, 1
      %p109 = por %p107, %p108
      %p110 = scmp.ne.s32.totalorder %s99, %s100
      %p111 = scmp.eq.s32.totalorder %s23, 0
      %p112 = por %p110, %p111
      %p113 = scmp.ne.s32.totalorder %s99, %s100
      %p114 = scmp.eq.s32.totalorder %s24, 1
      %p115 = por %p113, %p114
      %p117 = scmp.ne.s32.totalorder %s100, %s116
      %p118 = scmp.eq.s32.totalorder %s24, 0
      %p119 = por %p117, %p118
      %s120 = ssub.s32 %s18, %s25
      %p121 = scmp.eq.s32.totalorder %s120, 0
      %s123 = sadd.s32 %s122, 1
      %s124 = scalar_select %p121, %s122, %s123
      %p127 = pneg %p121
      %p128 = scmp.eq.s32.totalorder %s18, 1
      %p129 = por %p127, %p128
      %p130 = scmp.ne.s32.totalorder %s122, %s125
      %p131 = scmp.eq.s32.totalorder %s18, 0
      %p132 = por %p130, %p131
      %p133 = scmp.ne.s32.totalorder %s122, %s125
      %p134 = scmp.eq.s32.totalorder %s23, 1
      %p135 = por %p133, %p134
      %p136 = scmp.ne.s32.totalorder %s125, %s126
      %p137 = scmp.eq.s32.totalorder %s23, 0
      %p138 = por %p136, %p137
      %p139 = scmp.ne.s32.totalorder %s125, %s126
      %p140 = scmp.eq.s32.totalorder %s24, 1
      %p141 = por %p139, %p140
      %p143 = scmp.ne.s32.totalorder %s126, %s142
      %p144 = scmp.eq.s32.totalorder %s24, 0
      %p145 = por %p143, %p144
      %s146 = ssub.s32 %s18, %s25
      %p147 = scmp.eq.s32.totalorder %s146, 0
      %s149 = sadd.s32 %s148, 1
      %s150 = scalar_select %p147, %s148, %s149
      %p153 = pneg %p147
      %p154 = scmp.eq.s32.totalorder %s18, 1
      %p155 = por %p153, %p154
      %p156 = scmp.ne.s32.totalorder %s148, %s151
      %p157 = scmp.eq.s32.totalorder %s18, 0
      %p158 = por %p156, %p157
      %p159 = scmp.ne.s32.totalorder %s148, %s151
      %p160 = scmp.eq.s32.totalorder %s23, 1
      %p161 = por %p159, %p160
      %p162 = scmp.ne.s32.totalorder %s151, %s152
      %p163 = scmp.eq.s32.totalorder %s23, 0
      %p164 = por %p162, %p163
      %p165 = scmp.ne.s32.totalorder %s151, %s152
      %p166 = scmp.eq.s32.totalorder %s24, 1
      %p167 = por %p165, %p166
      %p169 = scmp.ne.s32.totalorder %s152, %s168
      %p170 = scmp.eq.s32.totalorder %s24, 0
      %p171 = por %p169, %p170
      %p172 = scmp.le.s32.totalorder 1, %s18
      %p173 = scmp.lt.s32.totalorder %s18, 3
      %p174 = pnand %p172, %p173
      %p175 = pneg %p174
      // Predicated region
      $region9: #{tpu_custom_call.1} parent=5 // pred_check
        _
      $region10: #{tpu_custom_call.1} parent=5 // pred_check_branch
        %177 = sbr.rel (%p174) target = $region12
      $region11: #{tpu_custom_call.1} parent=5 // pred_region
        %s178 = ssub.s32 %s18, 1
        // Predicated region
        $region13: #{tpu_custom_call.1} parent=11 // pred_check
          %p179 = pneg %p65
        $region14: #{tpu_custom_call.1} parent=11 // pred_check_branch
          %181 = sbr.rel (%p179) target = $region16
        $region15: #{tpu_custom_call.1} parent=11 // pred_region
          _
        $region16: #{tpu_custom_call.1} parent=11 // pred_fallthru
          _
        // Predicated region
        $region17: #{tpu_custom_call.1} parent=11 // pred_check
          %p182 = pneg %p86
        $region18: #{tpu_custom_call.1} parent=11 // pred_check_branch
          %184 = sbr.rel (%p182) target = $region20
        $region19: #{tpu_custom_call.1} parent=11 // pred_region
          _
        $region20: #{tpu_custom_call.1} parent=11 // pred_fallthru
          _
      $region12: #{tpu_custom_call.1} parent=5 // pred_fallthru
        _
      %p185 = scmp.lt.s32.totalorder %s18, 2
      // Predicated region
      $region21: #{tpu_custom_call.1} parent=5 // pred_check
        %p186 = pneg %p185
      $region22: #{tpu_custom_call.1} parent=5 // pred_check_branch
        %188 = sbr.rel (%p186) target = $region24
      $region23: #{tpu_custom_call.1} parent=5 // pred_region
        // Predicated region
        $region25: #{tpu_custom_call.1} parent=23 // pred_check
          %p189 = pneg %p38
        $region26: #{tpu_custom_call.1} parent=23 // pred_check_branch
          %191 = sbr.rel (%p189) target = $region28
        $region27: #{tpu_custom_call.1} parent=23 // pred_region
          %p192 = scmp.lt.s32.totalorder %s18, 1
          %s193 = scalar_select %p192, %s18, 1
          %s194 = smul.addr %s193, 4
          %s195 = scalar_lea.vmem %s0, %s194
        $region28: #{tpu_custom_call.1} parent=23 // pred_fallthru
          _
      $region24: #{tpu_custom_call.1} parent=5 // pred_fallthru
        _
      %p196 = scmp.le.s32.totalorder 1, %s18
      %p197 = scmp.lt.s32.totalorder %s18, 3
      %p198 = pnand %p196, %p197
      %p199 = pneg %p198
      // Predicated region
      $region29: #{tpu_custom_call.1} parent=5 // pred_check
        _
      $region30: #{tpu_custom_call.1} parent=5 // pred_check_branch
        %201 = sbr.rel (%p198) target = $region32
      $region31: #{tpu_custom_call.1} parent=5 // pred_region
        %s202 = ssub.s32 %s18, 1
        %p203 = scmp.lt.s32.totalorder %s23, 1
        %s204 = scalar_select %p203, %s23, 1
        %s205 = smul.addr %s204, 4
        %s206 = scalar_lea.vmem %s0, %s205
        %p207 = pneg %p44
        %p208 = pneg %p41
        %p209 = pneg %p65
        %p210 = pneg %p62
        %p211 = pneg %p86
        %p212 = pneg %p83
        %p213 = pneg %p112
        %p214 = pneg %p109
        %s215 = sand.u32 %s99, 1
        %s216 = scalar_lea.sflag [#allocation3], %s215
        %s217 = sand.u32 %s99, 1
        %s218 = smul.addr %s217, 8
        %s219 = scalar_lea.vmem [#allocation2], %s218
        %p220 = pneg %p138
        %p221 = pneg %p135
        %s222 = sand.u32 %s125, 1
        %s223 = scalar_lea.sflag [#allocation5], %s222
        %s224 = sand.u32 %s125, 1
        %s225 = smul.addr %s224, 8
        %s226 = scalar_lea.vmem [#allocation4], %s225
        %p227 = pneg %p164
        %p228 = pneg %p161
        %p229 = scmp.lt.s32.totalorder %s23, 1
        %s230 = scalar_select %p229, %s23, 1
        %s231 = smul.addr %s230, 8
        %s232 = scalar_lea.vmem %s5, %s231
        %p233 = scmp.lt.s32.totalorder %s23, 1
        %s234 = scalar_select %p233, %s23, 1
        %s235 = smul.addr %s234, 4
        %s236 = scalar_lea.vmem %s0, %s235
        %p237 = scmp.lt.s32.totalorder %s23, 1
        %s238 = scalar_select %p237, %s23, 1
        %s239 = smul.addr %s238, 8
        %s240 = scalar_lea.vmem %s5, %s239
        %v242 = vld [vmem:[%s236] sm:$0xf]
        %v243 = vld [vmem:[%s1] sm:$0xf]
        %v244 = vld [vmem:[%s1 + $0x4] sm:$0xf]
        %v245 = vld [vmem:[%s1 + $0x8] sm:$0xf]
        %v246 = vld [vmem:[%s1 + $0xc] sm:$0xf]
        %v247 = vld [vmem:[%s2] sm:$0x1]
        %v249 = vlaneseq
        %v250 = vshrl.u32 %v249, 7
        %v251 = vsub.s32 0, %v250
        %v252 = vrot.slane %v247, %v251
        %v258 = vunpack.c.l.b16 %v243
        %v259 = vunpack.c.l.b16 %v244
        %v260 = vunpack.c.l.b16 %v245
        %v261 = vunpack.c.l.b16 %v246
        %v262 = vpack.c.b16 %v259, %v258
        %v263 = vpack.c.b16 %v261, %v260
        %vm266 = vcmask 261120
        %v268 = vsel %vm266, %v242, 0
        %270 = vmatprep.subr.bf16.mxu0 0
        %271 = vmatpush1.bf16.msra.mxu0 %v262
        %272 = vmatprep.subr.bf16.mxu0 0
        %273 = vmatpush1.bf16.msra.mxu0 %v263
        %274 = vmatprep.subr.bf16.mxu0 0
        %275 = vmatpush1.bf16.msra.mxu0 0
        %276 = vmatprep.subr.bf16.mxu0 0
        %277 = vmatpush1.bf16.msra.mxu0 0
        %278 = vmatprep.subr.bf16.mxu0 0
        %279 = vmatpush1.bf16.msra.mxu0 0
        %280 = vmatprep.subr.bf16.mxu0 0
        %281 = vmatpush1.bf16.msra.mxu0 0
        %282 = vmatprep.subr.bf16.mxu0 0
        %283 = vmatpush1.bf16.msra.mxu0 0
        %284 = vmatprep.subr.bf16.mxu0 0
        %285 = vmatpush1.bf16.msra.mxu0 0
        %286 = vmatprep.subr.bf16.mxu0 0
        %287 = vmatpush1.bf16.msra.mxu0 0
        %288 = vmatprep.subr.bf16.mxu0 0
        %289 = vmatpush1.bf16.msra.mxu0 0
        %290 = vmatprep.subr.bf16.mxu0 0
        %291 = vmatpush1.bf16.msra.mxu0 0
        %292 = vmatprep.subr.bf16.mxu0 0
        %293 = vmatpush1.bf16.msra.mxu0 0
        %294 = vmatprep.subr.bf16.mxu0 0
        %295 = vmatpush1.bf16.msra.mxu0 0
        %296 = vmatprep.subr.bf16.mxu0 0
        %297 = vmatpush1.bf16.msra.mxu0 0
        %298 = vmatprep.subr.bf16.mxu0 0
        %299 = vmatpush1.bf16.msra.mxu0 0
        %300 = vmatprep.subr.bf16.mxu0 0
        %301 = vmatpush1.bf16.msra.mxu0 0
        %302 = vmatprep.mubr.bf16.mxu0 0
        %303 = vmatmul.mubr.bf16.gmra.mrb[0].mxu0 %v268
        %v304 = vpop.f32.mrb[0].mxu0
        %v305 = vadd.f32 %v252, %v304
        %v306 = vpop.f32.mrb[0].mxu0
        %v307 = vpop.f32.mrb[0].mxu0
        %v308 = vpop.f32.mrb[0].mxu0
        %309 = vdwg.mxu0
        %vm310 = vcmask 130048
        %v311 = vsel %vm310, %v305, -inf
        %312 = vmax.xlane.f32.xlu0 %v311
        %v313 = vpop.xlane.xlu0 %312
        %v314 = vsub.f32 %v305, %v313
        %v315 = vmul.f32 %v314, 1.442695
        %v316 = vpow.pop %v315
        %v317 = vsel %vm310, %v316, 0.0
        %318 = vadd.xlane.f32.xlu0 %v317
        %v319 = vpop.xlane.xlu0 %318
        %v320 = vlog2.pop %v319
        %v321 = vmul.f32 %v320, 0.6931472
        %v322 = vsub.f32 %v314, %v321
        %323 = vst.msk [vmem:[%s219] sm:$0xff] %vm310, %v322
        %v324 = vrcp.pop %v319
        %v325 = vmul.f32 %v316, %v324
        %326 = vst.msk [vmem:[%s226] sm:$0xff] %vm310, %v325
        %v327 = vlaneseq
        %v328 = vand.u32 %v327, 127
        %vm329 = vcmp.eq.f32.partialorder %v305, %v313
        %v330 = vsel %vm329, %v328, 16
        %v331 = vsel %vm310, %v330, 2147483647
        %v332 = vand.u32 %v331, 65535
        %v333 = vshra.s32 %v331, 16
        %v334 = vcvt.s32.f32 %v332
        %v335 = vcvt.s32.f32 %v333
        %336 = vmin.xlane.f32.xlu0 %v335
        %v337 = vpop.xlane.xlu0 %336
        %vm338 = vcmp.eq.f32.partialorder %v335, %v337
        %v339 = vsel %vm338, %v334, inf
        %340 = vmin.xlane.f32.xlu0 %v339
        %v341 = vpop.xlane.xlu0 %340
        %v342 = vcvt.f32.s32 %v341
        %v343 = vcvt.f32.s32 %v337
        %v344 = vshll.u32 %v343, 16
        %v345 = vadd.s32 %v344, %v342
        %vm346 = vcmask 7168
        %347 = vst.msk [vmem:[%s240] sm:$0xff] %vm346, %v345
        %s348 = sand.u32 %s99, 1
        %s349 = scalar_lea.sflag [#allocation3], %s348
        %s350 = sand.u32 %s99, 1
        %s351 = smul.addr %s350, 8
        %s352 = scalar_lea.vmem [#allocation2], %s351
        %s353 = sand.u32 %s125, 1
        %s354 = scalar_lea.sflag [#allocation5], %s353
        %s355 = sand.u32 %s125, 1
        %s356 = smul.addr %s355, 8
        %s357 = scalar_lea.vmem [#allocation4], %s356
        %p358 = scmp.lt.s32.totalorder %s23, 1
        %s359 = scalar_select %p358, %s23, 1
        %s360 = smul.addr %s359, 8
        %s361 = scalar_lea.vmem %s5, %s360
        // Predicated region
        $region33: #{tpu_custom_call.1} parent=31 // pred_check
          %p362 = pneg %p109
        $region34: #{tpu_custom_call.1} parent=31 // pred_check_branch
          %364 = sbr.rel (%p362) target = $region36
        $region35: #{tpu_custom_call.1} parent=31 // pred_region
          %s366 = ssub.s32 128, 128
          %367 = vsyncadd %s349, %s366
          %s368 = smul.addr %s23, 128
          %s369 = scalar_lea.hbm %s3, %s368
          %s371 = sshll.u32 %s352, 4
          %s372 = int_to_ptr.vmem [resolvable:$true] %s371
          %374 = dma.vmem_to_hbm [thread:$0]  %s372, 128, %s369, %s349
        $region36: #{tpu_custom_call.1} parent=31 // pred_fallthru
          _
        // Predicated region
        $region37: #{tpu_custom_call.1} parent=31 // pred_check
          %p375 = pneg %p135
        $region38: #{tpu_custom_call.1} parent=31 // pred_check_branch
          %377 = sbr.rel (%p375) target = $region40
        $region39: #{tpu_custom_call.1} parent=31 // pred_region
          %s379 = ssub.s32 128, 128
          %380 = vsyncadd %s354, %s379
          %s381 = smul.addr %s23, 128
          %s382 = scalar_lea.hbm %s4, %s381
          %s384 = sshll.u32 %s357, 4
          %s385 = int_to_ptr.vmem [resolvable:$true] %s384
          %387 = dma.vmem_to_hbm [thread:$0]  %s385, 128, %s382, %s354
        $region40: #{tpu_custom_call.1} parent=31 // pred_fallthru
          _
        // Predicated region
        $region41: #{tpu_custom_call.1} parent=31 // pred_check
          %p388 = pneg %p161
        $region42: #{tpu_custom_call.1} parent=31 // pred_check_branch
          %390 = sbr.rel (%p388) target = $region44
        $region43: #{tpu_custom_call.1} parent=31 // pred_region
          _
        $region44: #{tpu_custom_call.1} parent=31 // pred_fallthru
          _
      $region32: #{tpu_custom_call.1} parent=5 // pred_fallthru
        _
      %p391 = scmp.le.s32.totalorder 2, %s18
      // Predicated region
      $region45: #{tpu_custom_call.1} parent=5 // pred_check
        %p392 = pneg %p391
      $region46: #{tpu_custom_call.1} parent=5 // pred_check_branch
        %394 = sbr.rel (%p392) target = $region48
      $region47: #{tpu_custom_call.1} parent=5 // pred_region
        %s395 = ssub.s32 %s18, 2
        // Predicated region
        $region49: #{tpu_custom_call.1} parent=47 // pred_check
          %p396 = pneg %p115
        $region50: #{tpu_custom_call.1} parent=47 // pred_check_branch
          %398 = sbr.rel (%p396) target = $region52
        $region51: #{tpu_custom_call.1} parent=47 // pred_region
          %s399 = sand.u32 %s100, 1
          %s400 = scalar_lea.sflag [#allocation3], %s399
          %s401 = sand.u32 %s100, 1
          %s402 = smul.addr %s401, 8
          %s403 = scalar_lea.vmem [#allocation2], %s402
          %404 = dma.done %s400, 128
        $region52: #{tpu_custom_call.1} parent=47 // pred_fallthru
          _
        // Predicated region
        $region53: #{tpu_custom_call.1} parent=47 // pred_check
          %p405 = pneg %p141
        $region54: #{tpu_custom_call.1} parent=47 // pred_check_branch
          %407 = sbr.rel (%p405) target = $region56
        $region55: #{tpu_custom_call.1} parent=47 // pred_region
          %s408 = sand.u32 %s126, 1
          %s409 = scalar_lea.sflag [#allocation5], %s408
          %s410 = sand.u32 %s126, 1
          %s411 = smul.addr %s410, 8
          %s412 = scalar_lea.vmem [#allocation4], %s411
          %413 = dma.done %s409, 128
        $region56: #{tpu_custom_call.1} parent=47 // pred_fallthru
          _
        // Predicated region
        $region57: #{tpu_custom_call.1} parent=47 // pred_check
          %p414 = pneg %p167
        $region58: #{tpu_custom_call.1} parent=47 // pred_check_branch
          %416 = sbr.rel (%p414) target = $region60
        $region59: #{tpu_custom_call.1} parent=47 // pred_region
          %p417 = scmp.lt.s32.totalorder %s24, 1
          %s418 = scalar_select %p417, %s24, 1
          %s419 = smul.addr %s418, 8
          %s420 = scalar_lea.vmem %s5, %s419
        $region60: #{tpu_custom_call.1} parent=47 // pred_fallthru
          _
      $region48: #{tpu_custom_call.1} parent=5 // pred_fallthru
        _
    $region6: #{tpu_custom_call.1} parent=1 // loop_footer
      %s22 = sadd.s32 1, %s18
    $region7: #{tpu_custom_call.1} parent=1 // loop_footer_branch
      %17 = sbr.rel target = $region3
    $region8: #{tpu_custom_call.1} parent=1 // loop_exit
      _
    %421 = vsyncpa [#allocation3], 1
    %s422 = scalar_lea.sflag [#allocation3], 1
    %423 = vsyncpa %s422, 1
    %424 = vsyncpa [#allocation5], 1
    %s425 = scalar_lea.sflag [#allocation5], 1
    %426 = vsyncpa %s425, 1

</llo_original>
